<compile_context>
chip_gen: v7x
topology: tpu7x:2x2x1
jax: 0.10.0
libtpu: 0.0.40
codegen_flags: <defaults>
</compile_context>

<pallas_src>
import jax
import jax.numpy as jnp
from jax.experimental import pallas as pl
from jax.experimental.pallas import tpu as pltpu

IN_F = 178
HID = 16
OUT_F = 5


def mlp_kernel(x_ref, w1_ref, b1_ref, w2_ref, b2_ref, o_ref):
    # Cast the f32 x tile to bf16 in-kernel (VPU) -> bf16 x bf16 MXU matmul
    # with f32 accumulation.
    x_bf = x_ref[...].astype(jnp.bfloat16)
    h = jnp.dot(x_bf, w1_ref[...], preferred_element_type=jnp.float32)
    h = jax.nn.sigmoid(h + b1_ref[...])          # f32 bias + sigmoid (VPU/EUP)
    # Output layer (tiny: K=16, N=5); activations cast to bf16 to match W2.
    y = jnp.dot(h.astype(jnp.bfloat16), w2_ref[...],
                preferred_element_type=jnp.float32)
    o_ref[...] = (y + b2_ref[...]).astype(o_ref.dtype)


def _round_up(n, m):
    return ((n + m - 1) // m) * m


def _default_block_b():
    """Generation-aware default batch tile (rows)."""
    try:
        kind = jax.devices()[0].device_kind.lower()
    except Exception:
        return 4096
    if "v5e" in kind or "v5 lite" in kind or "v5litepod" in kind:
        return 2048   # 16 MiB scoped-VMEM default on v5e
    return 4096       # 32 MiB scoped-VMEM default on v6e / v7x


def my_mlp_forward(x, w1, b1, w2, b2, *, block_b=None):
    """x: (B, 178) f32; w1: (178, 16); b1: (1, 16); w2: (16, 5); b2: (1, 5)."""
    B = x.shape[0]
    if block_b is None:
        block_b = _default_block_b()

    if B <= block_b:
        T = B                        # exact single tile, no masked tail
    else:
        T = _round_up(block_b, 16)   # multi-tile; Pallas masks the ragged tail
    grid = (pl.cdiv(B, T),)

    # Weights to bf16 once (tiny arrays); x stays f32 and is cast in-kernel.
    w1_bf = w1.astype(jnp.bfloat16)
    w2_bf = w2.astype(jnp.bfloat16)

    return pl.pallas_call(
        mlp_kernel,
        out_shape=jax.ShapeDtypeStruct((B, OUT_F), jnp.float32),
        grid=grid,
        in_specs=[
            # x: tiled over batch; feature dim stays whole (178 == full dim).
            pl.BlockSpec((T, IN_F), lambda i: (i, 0)),
            # Weights/biases: full-size blocks, constant index_map -> VMEM-resident.
            pl.BlockSpec((IN_F, HID), lambda i: (0, 0)),
            pl.BlockSpec((1, HID), lambda i: (0, 0)),
            pl.BlockSpec((HID, OUT_F), lambda i: (0, 0)),
            pl.BlockSpec((1, OUT_F), lambda i: (0, 0)),
        ],
        out_specs=pl.BlockSpec((T, OUT_F), lambda i: (i, 0)),
        compiler_params=pltpu.CompilerParams(
            # Independent batch tiles -> shard grid across TensorCores (v7x);
            # harmless on single-core v5e/v6e.
            dimension_semantics=("parallel",),
        ),
        cost_estimate=pl.CostEstimate(
            flops=2 * B * (IN_F * HID + HID * OUT_F),
            transcendentals=B * HID,
            bytes_accessed=(B * IN_F * 4 + B * OUT_F * 4
                            + IN_F * HID * 2 + HID * OUT_F * 2
                            + HID * 4 + OUT_F * 4),
        ),
    )(x, w1_bf, b1, w2_bf, b2)


def init_params(key):
    """Mimics PyTorch nn.Linear default init: U(-1/sqrt(fan_in), +1/sqrt(fan_in))."""
    k1, k2, k3, k4 = jax.random.split(key, 4)
    bound1 = 1.0 / jnp.sqrt(IN_F)
    bound2 = 1.0 / jnp.sqrt(HID)
    # Stored as (in_features, out_features) == transpose of PyTorch's weight layout.
    w1 = jax.random.uniform(k1, (IN_F, HID), jnp.float32, -bound1, bound1)
    b1 = jax.random.uniform(k2, (1, HID), jnp.float32, -bound1, bound1)
    w2 = jax.random.uniform(k3, (HID, OUT_F), jnp.float32, -bound2, bound2)
    b2 = jax.random.uniform(k4, (1, OUT_F), jnp.float32, -bound2, bound2)
    return w1, b1, w2, b2


def reference_forward_f32(x, w1, b1, w2, b2):
    h = jax.nn.sigmoid(x @ w1 + b1)
    return h @ w2 + b2


def reference_forward_bf16(x, w1, b1, w2, b2):
    # Same bf16 rounding of x / W1 / W2 / hidden activations as the kernel,
    # math in f32.
    xb = x.astype(jnp.bfloat16).astype(jnp.float32)
    w1b = w1.astype(jnp.bfloat16).astype(jnp.float32)
    w2b = w2.astype(jnp.bfloat16).astype(jnp.float32)
    h = jax.nn.sigmoid(xb @ w1b + b1)
    hb = h.astype(jnp.bfloat16).astype(jnp.float32)
    return hb @ w2b + b2


if __name__ == "__main__":
    key = jax.random.PRNGKey(0)
    kx, kp, kx2 = jax.random.split(key, 3)
    w1, b1, w2, b2 = init_params(kp)

    # Small demo batch (single exact tile, grid = 1).
    B = 8
    x = jax.random.normal(kx, (B, IN_F), dtype=jnp.float32)
    out = jax.block_until_ready(my_mlp_forward(x, w1, b1, w2, b2))
    assert out.shape == (B, OUT_F)
    assert jnp.allclose(out, reference_forward_bf16(x, w1, b1, w2, b2),
                        atol=1e-4, rtol=1e-4)
    assert jnp.allclose(out, reference_forward_f32(x, w1, b1, w2, b2),
                        atol=3e-2, rtol=0)

    # Exercise the multi-tile path with a ragged (masked) last block:
    # B2 = 300, T = 128 -> grid = 3, last block has 44 valid rows.
    B2 = 300
    x2 = jax.random.normal(kx2, (B2, IN_F), dtype=jnp.float32)
    out2 = jax.block_until_ready(my_mlp_forward(x2, w1, b1, w2, b2, block_b=128))
    assert out2.shape == (B2, OUT_F)
    assert jnp.allclose(out2, reference_forward_bf16(x2, w1, b1, w2, b2),
                        atol=1e-4, rtol=1e-4)
    assert jnp.allclose(out2, reference_forward_f32(x2, w1, b1, w2, b2),
                        atol=3e-2, rtol=0)

    print("KERNEL_OK")
</pallas_src>

<mosaic_0001>
module attributes {stable_mosaic.version = 11 : i64} {
  func.func @mlp_kernel(%arg0: i32, %arg1: memref<8x178xf32, #tpu.memory_space<vmem>>, %arg2: memref<178x16xbf16, #tpu.memory_space<vmem>>, %arg3: memref<1x16xf32, #tpu.memory_space<vmem>>, %arg4: memref<16x5xbf16, #tpu.memory_space<vmem>>, %arg5: memref<1x5xf32, #tpu.memory_space<vmem>>, %arg6: memref<8x5xf32, #tpu.memory_space<vmem>>) attributes {dimension_semantics = [#tpu.dimension_semantics<parallel>], iteration_bounds = array<i64: 1>, scalar_prefetch = 0 : i64, scratch_operands = 0 : i64, tpu.core_type = #tpu.core_type<tc>, window_params = [{transform_indices = @transform_0, window_bounds = array<i64: 8, 178>}, {pipeline_mode = #tpu.pipeline_mode<synchronous>, transform_indices = @transform_1, window_bounds = array<i64: 178, 16>}, {pipeline_mode = #tpu.pipeline_mode<synchronous>, transform_indices = @transform_2, window_bounds = array<i64: 1, 16>}, {pipeline_mode = #tpu.pipeline_mode<synchronous>, transform_indices = @transform_3, window_bounds = array<i64: 16, 5>}, {pipeline_mode = #tpu.pipeline_mode<synchronous>, transform_indices = @transform_4, window_bounds = array<i64: 1, 5>}, {transform_indices = @transform_5, window_bounds = array<i64: 8, 5>}]} {
    %c0 = arith.constant 0 : index
    %c0_0 = arith.constant 0 : index
    %0 = vector.load %arg1[%c0, %c0_0] : memref<8x178xf32, #tpu.memory_space<vmem>>, vector<8x178xf32>
    %1 = arith.truncf %0 : vector<8x178xf32> to vector<8x178xbf16>
    %c0_1 = arith.constant 0 : index
    %c0_2 = arith.constant 0 : index
    %2 = vector.load %arg2[%c0_1, %c0_2] : memref<178x16xbf16, #tpu.memory_space<vmem>>, vector<178x16xbf16>
    %cst = arith.constant dense<0.000000e+00> : vector<8x16xf32>
    %3 = tpu.matmul %1, %2, %cst {dimension_numbers = #tpu.dot_dimension_numbers<[1], [0], [0], [1], [0, 0, 1, 1], [], []>} : vector<8x178xbf16>, vector<178x16xbf16>, vector<8x16xf32> -> vector<8x16xf32>
    %c0_3 = arith.constant 0 : index
    %c0_4 = arith.constant 0 : index
    %4 = vector.load %arg3[%c0_3, %c0_4] : memref<1x16xf32, #tpu.memory_space<vmem>>, vector<1x16xf32>
    %5 = vector.broadcast %4 : vector<1x16xf32> to vector<8x16xf32>
    %6 = arith.addf %3, %5 : vector<8x16xf32>
    %7 = arith.negf %6 : vector<8x16xf32>
    %8 = math.exp %7 : vector<8x16xf32>
    %cst_5 = arith.constant 1.000000e+00 : f32
    %9 = vector.broadcast %cst_5 : f32 to vector<8x16xf32>
    %10 = arith.addf %9, %8 : vector<8x16xf32>
    %11 = arith.divf %9, %10 : vector<8x16xf32>
    %12 = arith.truncf %11 : vector<8x16xf32> to vector<8x16xbf16>
    %c0_6 = arith.constant 0 : index
    %c0_7 = arith.constant 0 : index
    %13 = vector.load %arg4[%c0_6, %c0_7] : memref<16x5xbf16, #tpu.memory_space<vmem>>, vector<16x5xbf16>
    %cst_8 = arith.constant dense<0.000000e+00> : vector<8x5xf32>
    %14 = tpu.matmul %12, %13, %cst_8 {dimension_numbers = #tpu.dot_dimension_numbers<[1], [0], [0], [1], [0, 0, 1, 1], [], []>} : vector<8x16xbf16>, vector<16x5xbf16>, vector<8x5xf32> -> vector<8x5xf32>
    %c0_9 = arith.constant 0 : index
    %c0_10 = arith.constant 0 : index
    %15 = vector.load %arg5[%c0_9, %c0_10] : memref<1x5xf32, #tpu.memory_space<vmem>>, vector<1x5xf32>
    %16 = vector.broadcast %15 : vector<1x5xf32> to vector<8x5xf32>
    %17 = arith.addf %14, %16 : vector<8x5xf32>
    %c0_11 = arith.constant 0 : index
    %c0_12 = arith.constant 0 : index
    %18 = vector.load %arg6[%c0_11, %c0_12] : memref<8x5xf32, #tpu.memory_space<vmem>>, vector<8x5xf32>
    tpu.vector_store %arg6[%c0_11, %c0_12], %17 {strides = array<i32>} : memref<8x5xf32, #tpu.memory_space<vmem>>, vector<8x5xf32>,
    return
  }
  func.func @transform_0(%arg0: i32) -> (i32, i32) {
    %c0_i32 = arith.constant 0 : i32
    %c0_i32_0 = arith.constant 0 : i32
    return %arg0, %c0_i32 : i32, i32
  }
  func.func @transform_1(%arg0: i32) -> (i32, i32) {
    %c0_i32 = arith.constant 0 : i32
    %c0_i32_0 = arith.constant 0 : i32
    %c0_i32_1 = arith.constant 0 : i32
    return %c0_i32, %c0_i32_0 : i32, i32
  }
  func.func @transform_2(%arg0: i32) -> (i32, i32) {
    %c0_i32 = arith.constant 0 : i32
    %c0_i32_0 = arith.constant 0 : i32
    %c0_i32_1 = arith.constant 0 : i32
    return %c0_i32, %c0_i32_0 : i32, i32
  }
  func.func @transform_3(%arg0: i32) -> (i32, i32) {
    %c0_i32 = arith.constant 0 : i32
    %c0_i32_0 = arith.constant 0 : i32
    %c0_i32_1 = arith.constant 0 : i32
    return %c0_i32, %c0_i32_0 : i32, i32
  }
  func.func @transform_4(%arg0: i32) -> (i32, i32) {
    %c0_i32 = arith.constant 0 : i32
    %c0_i32_0 = arith.constant 0 : i32
    %c0_i32_1 = arith.constant 0 : i32
    return %c0_i32, %c0_i32_0 : i32, i32
  }
  func.func @transform_5(%arg0: i32) -> (i32, i32) {
    %c0_i32 = arith.constant 0 : i32
    %c0_i32_0 = arith.constant 0 : i32
    return %arg0, %c0_i32 : i32, i32
  }
}

</mosaic_0001>

<llo_original>
// kernel: tpu_custom_call.1
$region0: #{tpu_custom_call.1}
  #allocation0 [shape = 'u32[]', space=smem, size = 0x4, offset = 0x4, fixed_abs, tag = 'smem constant byte address 0x4 - core index']
  #allocation1 [shape = 'u32[144,128]{1,0:T(1,128)}', space=vmem, size = 0x12000, scoped, tag = 'internal scratch']
  %s0 = inlined_call_operand.vmem [shape: f32[8,178], index: 0, kind: input, shape index: {}]
  %s1 = inlined_call_operand.vmem [shape: bf16[178,16], index: 1, kind: input, shape index: {}]
  %s2 = inlined_call_operand.vmem [shape: f32[1,16], index: 2, kind: input, shape index: {}]
  %s3 = inlined_call_operand.vmem [shape: bf16[16,5], index: 3, kind: input, shape index: {}]
  %s4 = inlined_call_operand.vmem [shape: f32[1,5], index: 4, kind: input, shape index: {}]
  %s5 = inlined_call_operand.hbm [shape: f32[8,5], index: 5, kind: output, shape index: {}]
  %s6 = sld [smem:[#allocation0]]
  $region30: #{tpu_custom_call.1} parent=0
    _
  %s8 = ssub.s32 1, %s6
  %s9 = scalar_select 0, %s8, %s6
  $region1: #{tpu_custom_call.1} parent=0
    #allocation2 [shape = 'u8[4096]{0}', space=vmem, size = 0x1000, scoped, tag = 'output window, operand 0, single buffered']
    #allocation3 [shape = 's32[1]{0}', space=sflag, size = 0x4, scoped, tag = 'scoped memory for tpu_custom_call.1']
    %10 = vsyncpa [#allocation3], 0
    // Predicated region
    $region2: #{tpu_custom_call.1} parent=1 // pred_check
      _
    $region3: #{tpu_custom_call.1} parent=1 // pred_check_branch
      %12 = sbr.rel (0) target = $region5
    $region4: #{tpu_custom_call.1} parent=1 // pred_region
      _
    $region5: #{tpu_custom_call.1} parent=1 // pred_fallthru
      _
    // Predicated region
    $region6: #{tpu_custom_call.1} parent=1 // pred_check
      _
    $region7: #{tpu_custom_call.1} parent=1 // pred_check_branch
      %14 = sbr.rel (0) target = $region9
    $region8: #{tpu_custom_call.1} parent=1 // pred_region
      _
    $region9: #{tpu_custom_call.1} parent=1 // pred_fallthru
      _
    // Predicated region
    $region10: #{tpu_custom_call.1} parent=1 // pred_check
      _
    $region11: #{tpu_custom_call.1} parent=1 // pred_check_branch
      %16 = sbr.rel (0) target = $region13
    $region12: #{tpu_custom_call.1} parent=1 // pred_region
      _
    $region13: #{tpu_custom_call.1} parent=1 // pred_fallthru
      _
    // Predicated region
    $region14: #{tpu_custom_call.1} parent=1 // pred_check
      _
    $region15: #{tpu_custom_call.1} parent=1 // pred_check_branch
      %18 = sbr.rel (0) target = $region17
    $region16: #{tpu_custom_call.1} parent=1 // pred_region
      _
    $region17: #{tpu_custom_call.1} parent=1 // pred_fallthru
      _
    // Predicated region
    $region18: #{tpu_custom_call.1} parent=1 // pred_check
      _
    $region19: #{tpu_custom_call.1} parent=1 // pred_check_branch
      %20 = sbr.rel (0) target = $region21
    $region20: #{tpu_custom_call.1} parent=1 // pred_region
      _
    $region21: #{tpu_custom_call.1} parent=1 // pred_fallthru
      _
    %v22 = vld [vmem:[%s0] sm:$0xff]
    %v23 = vld [vmem:[%s0 + $0x8] sm:$0xff]
    %v24 = vpack.c.bf16 %v22, %v22
    %v25 = vpack.c.bf16 %v23, %v23
    %v26 = vld [vmem:[%s1] sm:$0xf]
    %v27 = vld [vmem:[%s1 + $0x4] sm:$0xf]
    %v28 = vld [vmem:[%s1 + $0x8] sm:$0xf]
    %v29 = vld [vmem:[%s1 + $0xc] sm:$0xf]
    %v30 = vld [vmem:[%s1 + $0x10] sm:$0xf]
    %v31 = vld [vmem:[%s1 + $0x14] sm:$0xf]
    %v32 = vld [vmem:[%s1 + $0x18] sm:$0xf]
    %v33 = vld [vmem:[%s1 + $0x1c] sm:$0xf]
    %v34 = vld [vmem:[%s1 + $0x20] sm:$0xf]
    %v35 = vld [vmem:[%s1 + $0x24] sm:$0xf]
    %v36 = vld [vmem:[%s1 + $0x28] sm:$0xf]
    %v37 = vld [vmem:[%s1 + $0x2c] sm:$0xf]
    %v38 = vld [vmem:[%s1 + $0x30] sm:$0xf]
    %v39 = vld [vmem:[%s1 + $0x34] sm:$0xf]
    %v40 = vld [vmem:[%s1 + $0x38] sm:$0xf]
    %v41 = vld [vmem:[%s1 + $0x3c] sm:$0xf]
    %v42 = vld [vmem:[%s1 + $0x40] sm:$0xf]
    %v43 = vld [vmem:[%s1 + $0x44] sm:$0xf]
    %v44 = vld [vmem:[%s1 + $0x48] sm:$0xf]
    %v45 = vld [vmem:[%s1 + $0x4c] sm:$0xf]
    %v46 = vld [vmem:[%s1 + $0x50] sm:$0xf]
    %v47 = vld [vmem:[%s1 + $0x54] sm:$0xf]
    %v48 = vld [vmem:[%s1 + $0x58] sm:$0x1]
    %v49 = vld [vmem:[%s2] sm:$0x1]
    %v51 = vlaneseq
    %v52 = vshrl.u32 %v51, 7
    %v53 = vsub.s32 0, %v52
    %v54 = vrot.slane %v49, %v53
    %v79 = vunpack.c.l.b16 %v26
    %v80 = vunpack.c.l.b16 %v27
    %v81 = vunpack.c.l.b16 %v28
    %v82 = vunpack.c.l.b16 %v29
    %v83 = vunpack.c.l.b16 %v30
    %v84 = vunpack.c.l.b16 %v31
    %v85 = vunpack.c.l.b16 %v32
    %v86 = vunpack.c.l.b16 %v33
    %v87 = vunpack.c.l.b16 %v34
    %v88 = vunpack.c.l.b16 %v35
    %v89 = vunpack.c.l.b16 %v36
    %v90 = vunpack.c.l.b16 %v37
    %v91 = vunpack.c.l.b16 %v38
    %v92 = vunpack.c.l.b16 %v39
    %v93 = vunpack.c.l.b16 %v40
    %v94 = vunpack.c.l.b16 %v41
    %v95 = vunpack.c.l.b16 %v42
    %v96 = vunpack.c.l.b16 %v43
    %v97 = vunpack.c.l.b16 %v44
    %v98 = vunpack.c.l.b16 %v45
    %v99 = vunpack.c.l.b16 %v46
    %v100 = vunpack.c.l.b16 %v47
    %v101 = vunpack.c.l.b16 %v48
    %v102 = vpack.c.b16 %v80, %v79
    %v103 = vpack.c.b16 %v82, %v81
    %v104 = vpack.c.b16 %v84, %v83
    %v105 = vpack.c.b16 %v86, %v85
    %v106 = vpack.c.b16 %v88, %v87
    %v107 = vpack.c.b16 %v90, %v89
    %v108 = vpack.c.b16 %v92, %v91
    %v109 = vpack.c.b16 %v94, %v93
    %v110 = vpack.c.b16 %v96, %v95
    %v111 = vpack.c.b16 %v98, %v97
    %v112 = vpack.c.b16 %v100, %v99
    %v113 = vpack.c.b16 %v101, %v101
    %vm125 = vcmask 408576
    %v127 = vsel %vm125, %v25, 0
    %vm129 = vcmask 1040384
    %v131 = vsel %vm129, %v113, 0
    %133 = vmatprep.subr.bf16.mxu0 0
    %134 = vmatpush1.bf16.msra.mxu0 %v102
    %135 = vmatprep.subr.bf16.mxu0 0
    %136 = vmatpush1.bf16.msra.mxu0 %v103
    %137 = vmatprep.subr.bf16.mxu0 0
    %138 = vmatpush1.bf16.msra.mxu0 %v104
    %139 = vmatprep.subr.bf16.mxu0 0
    %140 = vmatpush1.bf16.msra.mxu0 %v105
    %141 = vmatprep.subr.bf16.mxu0 0
    %142 = vmatpush1.bf16.msra.mxu0 %v106
    %143 = vmatprep.subr.bf16.mxu0 0
    %144 = vmatpush1.bf16.msra.mxu0 %v107
    %145 = vmatprep.subr.bf16.mxu0 0
    %146 = vmatpush1.bf16.msra.mxu0 %v108
    %147 = vmatprep.subr.bf16.mxu0 0
    %148 = vmatpush1.bf16.msra.mxu0 %v109
    %149 = vmatprep.subr.bf16.mxu0 0
    %150 = vmatpush1.bf16.msra.mxu0 %v110
    %151 = vmatprep.subr.bf16.mxu0 0
    %152 = vmatpush1.bf16.msra.mxu0 %v111
    %153 = vmatprep.subr.bf16.mxu0 0
    %154 = vmatpush1.bf16.msra.mxu0 %v112
    %155 = vmatprep.subr.bf16.mxu0 0
    %156 = vmatpush1.bf16.msra.mxu0 %v131
    %157 = vmatprep.subr.bf16.mxu0 0
    %158 = vmatpush1.bf16.msra.mxu0 0
    %159 = vmatprep.subr.bf16.mxu0 0
    %160 = vmatpush1.bf16.msra.mxu0 0
    %161 = vmatprep.subr.bf16.mxu0 0
    %162 = vmatpush1.bf16.msra.mxu0 0
    %163 = vmatprep.subr.bf16.mxu0 0
    %164 = vmatpush1.bf16.msra.mxu0 0
    %165 = vmatprep.mubr.bf16.mxu0 %v127
    %166 = vmatmul.mubr.bf16.gmra.mrb[0].mxu0 %v24
    %v167 = vpop.f32.mrb[0].mxu0
    %v168 = vadd.f32 %v54, %v167
    %v169 = vpop.f32.mrb[0].mxu0
    %v170 = vpop.f32.mrb[0].mxu0
    %v171 = vpop.f32.mrb[0].mxu0
    %172 = vdwg.mxu0
    %v173 = vxor.u32 %v168, 2147483648
    %v174 = vmul.f32 %v173, 1.442695
    %v175 = vpow.pop %v174
    %v176 = vadd.f32 %v175, 1.0
    %v177 = vrcp.pop %v176
    %v178 = vmul.f32 1.0, %v177
    %v179 = vpack.c.bf16 %v178, %v178
    %v180 = vld [vmem:[%s3] sm:$0xf]
    %v181 = vld [vmem:[%s3 + $0x4] sm:$0xf]
    %v182 = vld [vmem:[%s4] sm:$0x1]
    %v184 = vlaneseq
    %v185 = vshrl.u32 %v184, 7
    %v186 = vsub.s32 0, %v185
    %v187 = vrot.slane %v182, %v186
    %v191 = vunpack.c.l.b16 %v180
    %v192 = vunpack.c.l.b16 %v181
    %v193 = vpack.c.b16 %v192, %v191
    %vm195 = vcmask 130048
    %v197 = vsel %vm195, %v179, 0
    %199 = vmatprep.subr.bf16.mxu0 0
    %200 = vmatpush1.bf16.msra.mxu0 %v193
    %201 = vmatprep.subr.bf16.mxu0 0
    %202 = vmatpush1.bf16.msra.mxu0 0
    %203 = vmatprep.subr.bf16.mxu0 0
    %204 = vmatpush1.bf16.msra.mxu0 0
    %205 = vmatprep.subr.bf16.mxu0 0
    %206 = vmatpush1.bf16.msra.mxu0 0
    %207 = vmatprep.subr.bf16.mxu0 0
    %208 = vmatpush1.bf16.msra.mxu0 0
    %209 = vmatprep.subr.bf16.mxu0 0
    %210 = vmatpush1.bf16.msra.mxu0 0
    %211 = vmatprep.subr.bf16.mxu0 0
    %212 = vmatpush1.bf16.msra.mxu0 0
    %213 = vmatprep.subr.bf16.mxu0 0
    %214 = vmatpush1.bf16.msra.mxu0 0
    %215 = vmatprep.subr.bf16.mxu0 0
    %216 = vmatpush1.bf16.msra.mxu0 0
    %217 = vmatprep.subr.bf16.mxu0 0
    %218 = vmatpush1.bf16.msra.mxu0 0
    %219 = vmatprep.subr.bf16.mxu0 0
    %220 = vmatpush1.bf16.msra.mxu0 0
    %221 = vmatprep.subr.bf16.mxu0 0
    %222 = vmatpush1.bf16.msra.mxu0 0
    %223 = vmatprep.subr.bf16.mxu0 0
    %224 = vmatpush1.bf16.msra.mxu0 0
    %225 = vmatprep.subr.bf16.mxu0 0
    %226 = vmatpush1.bf16.msra.mxu0 0
    %227 = vmatprep.subr.bf16.mxu0 0
    %228 = vmatpush1.bf16.msra.mxu0 0
    %229 = vmatprep.subr.bf16.mxu0 0
    %230 = vmatpush1.bf16.msra.mxu0 0
    %231 = vmatprep.mubr.bf16.mxu0 0
    %232 = vmatmul.mubr.bf16.gmra.mrb[0].mxu0 %v197
    %v233 = vpop.f32.mrb[0].mxu0
    %v234 = vadd.f32 %v187, %v233
    %v235 = vpop.f32.mrb[0].mxu0
    %v236 = vpop.f32.mrb[0].mxu0
    %v237 = vpop.f32.mrb[0].mxu0
    %238 = vdwg.mxu0
    %vm239 = vcmask 39936
    %240 = vst.msk [vmem:[#allocation2] sm:$0xff] %vm239, %v234
    // Predicated region
    $region22: #{tpu_custom_call.1} parent=1 // pred_check
      _
    $region23: #{tpu_custom_call.1} parent=1 // pred_check_branch
      %242 = sbr.rel (0) target = $region25
    $region24: #{tpu_custom_call.1} parent=1 // pred_region
      %s244 = ssub.s32 128, 128
      %245 = vsyncadd [#allocation3], %s244
      %s247 = sshll.u32 [#allocation2], 4
      %s248 = int_to_ptr.vmem [resolvable:$true] %s247
      %250 = dma.vmem_to_hbm [thread:$0]  %s248, 128, %s5, [#allocation3]
    $region25: #{tpu_custom_call.1} parent=1 // pred_fallthru
      _
    // Predicated region
    $region26: #{tpu_custom_call.1} parent=1 // pred_check
      _
    $region27: #{tpu_custom_call.1} parent=1 // pred_check_branch
      %252 = sbr.rel (0) target = $region29
    $region28: #{tpu_custom_call.1} parent=1 // pred_region
      %253 = dma.done [#allocation3], 128
    $region29: #{tpu_custom_call.1} parent=1 // pred_fallthru
      _
    %254 = vsyncpa [#allocation3], 1

</llo_original>
